<compile_context>
chip_gen: v5e
topology: v5e:2x2
jax: 0.10.0
libtpu: 0.0.40
codegen_flags: <defaults>
</compile_context>

<pallas_src>
import jax
import jax.numpy as jnp
from jax.experimental import pallas as pl
from jax.experimental.pallas import tpu as pltpu


def _vl_bias_kernel(x_ref, w_ref, b_ref, o_ref):
    # x_ref: (tb, tn); w_ref / b_ref: (1, tn) — broadcast over the sublane
    # (batch) axis, matching PyTorch `input * weight + bias`.  Explicit astype
    # keeps mixed-dtype inputs (e.g. bf16 x, f32 params) well-defined.
    o_ref[...] = (x_ref[...] * w_ref[...] + b_ref[...]).astype(o_ref.dtype)


def _vl_nobias_kernel(x_ref, w_ref, o_ref):
    o_ref[...] = (x_ref[...] * w_ref[...]).astype(o_ref.dtype)


def _vmem_budgets():
    """Generation-aware (tile_budget, scoped_limit_cap, min_parallel_steps)."""
    try:
        cap = int(pltpu.get_tpu_info().vmem_capacity_bytes)
    except Exception:
        cap = 64 << 20  # conservative (v7x-sized) fallback
    if cap >= (96 << 20):
        # v5e / v6e: 128 MiB VMEM per TensorCore, single TC per chip.
        return 48 << 20, 96 << 20, 1
    # v7x: 64 MiB VMEM per TC, 2 TCs per chip -> force some parallel steps.
    return 24 << 20, 44 << 20, 4


def _choose_tiles(B, N, itemsize, budget_bytes, min_steps):
    """Pick (tb, tn).

    tn: lane-dense — full N whenever one sublane-packet of rows fits the
        budget (weight/bias then become a single resident block), otherwise
        the largest multiple of 128 that fits.
    tb: biggest row count whose double-buffered x + out working set stays
        under the budget (no arbitrary row cap — bytes-per-step is what
        matters for this mem-bound op), rounded to the dtype's sublane
        packing multiple, and split so at least `min_steps` grid steps exist
        when there is non-trivial work (v7x 2-TC sharding).
    """
    sub = max(8, 32 // itemsize)  # f32: 8, bf16: 16, int8/fp8: 32
    if N <= 128 or sub * N * itemsize * 4 <= budget_bytes:
        tn = N
    else:
        tn = (budget_bytes // (sub * itemsize * 4) // 128) * 128
        tn = int(max(128, min(tn, (N // 128) * 128)))

    tb = int(min(B, max(1, budget_bytes // (tn * itemsize * 4))))

    total_bytes = B * N * itemsize
    if min_steps > 1 and total_bytes > (4 << 20):
        steps = pl.cdiv(N, tn) * pl.cdiv(B, tb)
        if steps < min_steps:
            tb = min(tb, -(-B // min_steps))  # ceil(B / min_steps)

    if tb < B:
        tb = max(sub, (tb // sub) * sub)
    if tb >= B:
        tb = B
    return tb, tn


def vector_linear(x, weight, bias=None, *, tb=None, tn=None,
                  vmem_budget_bytes=None):
    """Pallas TPU implementation of VectorLinear.forward.

    x:      [B, N]   (feature axis last -> lane-dense)
    weight: [1, N]
    bias:   [1, N] or None
    """
    B, N = x.shape
    assert weight.shape == (1, N), weight.shape
    if bias is not None:
        assert bias.shape == (1, N), bias.shape

    out_dtype = jnp.result_type(
        x.dtype, weight.dtype, *((bias.dtype,) if bias is not None else ()))
    itemsize = jnp.dtype(x.dtype).itemsize
    out_itemsize = jnp.dtype(out_dtype).itemsize
    vec_itemsize = jnp.dtype(weight.dtype).itemsize

    auto_budget, limit_cap, min_steps = _vmem_budgets()
    budget = auto_budget if vmem_budget_bytes is None else int(vmem_budget_bytes)

    auto_tb, auto_tn = _choose_tiles(B, N, itemsize, budget, min_steps)
    tb = auto_tb if tb is None else tb
    tn = auto_tn if tn is None else tn

    # N-blocks on the OUTER grid axis, B-blocks inner: the (1, tn) weight/bias
    # block index is constant across consecutive steps, so Pallas keeps it
    # resident in VMEM instead of re-fetching it every step.
    grid = (pl.cdiv(N, tn), pl.cdiv(B, tb))

    x_spec = pl.BlockSpec((tb, tn), lambda j, i: (i, j))
    vec_spec = pl.BlockSpec((1, tn), lambda j, i: (0, j))
    out_spec = pl.BlockSpec((tb, tn), lambda j, i: (i, j))

    # Scoped VMEM must cover double-buffered x/out tiles + weight/bias rows.
    # Never clamp below the actual working set; cap under physical VMEM.
    tile_bytes = tb * tn * (itemsize + out_itemsize)   # one x buf + one out buf
    vec_bytes = tn * vec_itemsize
    needed = 2 * tile_bytes + 2 * 2 * vec_bytes
    vmem_limit = max(needed + (2 << 20), 16 << 20)
    vmem_limit = min(vmem_limit, limit_cap)
    vmem_limit = int(max(vmem_limit, needed + (1 << 20)))

    params = pltpu.CompilerParams(
        dimension_semantics=("parallel", "parallel"),
        vmem_limit_bytes=vmem_limit,
    )
    n_vecs = 1 if bias is None else 2
    cost = pl.CostEstimate(
        flops=(2 if bias is not None else 1) * B * N,
        transcendentals=0,
        bytes_accessed=B * N * (itemsize + out_itemsize) + n_vecs * N * vec_itemsize,
    )
    out_shape = jax.ShapeDtypeStruct((B, N), out_dtype)

    if bias is not None:
        return pl.pallas_call(
            _vl_bias_kernel,
            out_shape=out_shape,
            grid=grid,
            in_specs=[x_spec, vec_spec, vec_spec],
            out_specs=out_spec,
            compiler_params=params,
            cost_estimate=cost,
        )(x, weight, bias)
    return pl.pallas_call(
        _vl_nobias_kernel,
        out_shape=out_shape,
        grid=grid,
        in_specs=[x_spec, vec_spec],
        out_specs=out_spec,
        compiler_params=params,
        cost_estimate=cost,
    )(x, weight)


if __name__ == "__main__":
    key = jax.random.PRNGKey(0)
    kx, kw, kb, kx2 = jax.random.split(key, 4)

    # Small shapes consistent with the module: input [B, N], parameters [1, N].
    B, N = 8, 256
    x = jax.random.normal(kx, (B, N), dtype=jnp.float32)
    # reset_parameters(): normal_(std=0.01) for both weight and bias.
    weight = 0.01 * jax.random.normal(kw, (1, N), dtype=jnp.float32)
    bias = 0.01 * jax.random.normal(kb, (1, N), dtype=jnp.float32)

    # Small problem -> adaptive tiling collapses to a single whole-array block.
    out = jax.block_until_ready(vector_linear(x, weight, bias))
    ref = x * weight + bias
    assert out.shape == (B, N) and out.dtype == x.dtype
    assert jnp.allclose(out, ref, atol=1e-6), "bias path mismatch vs reference"

    # keep_bias=False path.
    out_nb = jax.block_until_ready(vector_linear(x, weight, None))
    assert jnp.allclose(out_nb, x * weight, atol=1e-6), "no-bias path mismatch"

    # Multi-step grid with a ragged batch tail (72 = 4*16 + 8): exercises the
    # resident weight/bias blocks, (N outer, B inner) ordering, masked edges.
    B2 = 72
    x2 = jax.random.normal(kx2, (B2, N), dtype=jnp.float32)
    out2 = jax.block_until_ready(vector_linear(x2, weight, bias, tb=16, tn=128))
    assert jnp.allclose(out2, x2 * weight + bias, atol=1e-6), "tiled path mismatch"

    # bf16 path: dtype-aware sublane packing multiple + explicit astype.
    xb = x.astype(jnp.bfloat16)
    wb = weight.astype(jnp.bfloat16)
    bb = bias.astype(jnp.bfloat16)
    outb = jax.block_until_ready(vector_linear(xb, wb, bb))
    refb = xb * wb + bb
    assert outb.dtype == jnp.bfloat16
    assert jnp.allclose(outb.astype(jnp.float32), refb.astype(jnp.float32),
                        atol=1e-2), "bf16 path mismatch"

    print("KERNEL_OK")
</pallas_src>

<mosaic_0001>
module attributes {stable_mosaic.version = 11 : i64} {
  func.func @_vl_bias_kernel(%arg0: i32, %arg1: i32, %arg2: memref<8x256xf32, #tpu.memory_space<vmem>>, %arg3: memref<1x256xf32, #tpu.memory_space<vmem>>, %arg4: memref<1x256xf32, #tpu.memory_space<vmem>>, %arg5: memref<8x256xf32, #tpu.memory_space<vmem>>) attributes {dimension_semantics = [#tpu.dimension_semantics<parallel>, #tpu.dimension_semantics<parallel>], iteration_bounds = array<i64: 1, 1>, scalar_prefetch = 0 : i64, scratch_operands = 0 : i64, tpu.core_type = #tpu.core_type<tc>, window_params = [{transform_indices = @transform_0, window_bounds = array<i64: 8, 256>}, {transform_indices = @transform_1, window_bounds = array<i64: 1, 256>}, {transform_indices = @transform_2, window_bounds = array<i64: 1, 256>}, {transform_indices = @transform_3, window_bounds = array<i64: 8, 256>}]} {
    %c0 = arith.constant 0 : index
    %c0_0 = arith.constant 0 : index
    %0 = vector.load %arg2[%c0, %c0_0] : memref<8x256xf32, #tpu.memory_space<vmem>>, vector<8x256xf32>
    %c0_1 = arith.constant 0 : index
    %c0_2 = arith.constant 0 : index
    %1 = vector.load %arg3[%c0_1, %c0_2] : memref<1x256xf32, #tpu.memory_space<vmem>>, vector<1x256xf32>
    %2 = vector.broadcast %1 : vector<1x256xf32> to vector<8x256xf32>
    %3 = arith.mulf %0, %2 : vector<8x256xf32>
    %c0_3 = arith.constant 0 : index
    %c0_4 = arith.constant 0 : index
    %4 = vector.load %arg4[%c0_3, %c0_4] : memref<1x256xf32, #tpu.memory_space<vmem>>, vector<1x256xf32>
    %5 = vector.broadcast %4 : vector<1x256xf32> to vector<8x256xf32>
    %6 = arith.addf %3, %5 : vector<8x256xf32>
    %c0_5 = arith.constant 0 : index
    %c0_6 = arith.constant 0 : index
    %7 = vector.load %arg5[%c0_5, %c0_6] : memref<8x256xf32, #tpu.memory_space<vmem>>, vector<8x256xf32>
    tpu.vector_store %arg5[%c0_5, %c0_6], %6 {strides = array<i32>} : memref<8x256xf32, #tpu.memory_space<vmem>>, vector<8x256xf32>,
    return
  }
  func.func @transform_0(%arg0: i32, %arg1: i32) -> (i32, i32) {
    %c0_i32 = arith.constant 0 : i32
    return %arg1, %arg0 : i32, i32
  }
  func.func @transform_1(%arg0: i32, %arg1: i32) -> (i32, i32) {
    %c0_i32 = arith.constant 0 : i32
    %c0_i32_0 = arith.constant 0 : i32
    return %c0_i32, %arg0 : i32, i32
  }
  func.func @transform_2(%arg0: i32, %arg1: i32) -> (i32, i32) {
    %c0_i32 = arith.constant 0 : i32
    %c0_i32_0 = arith.constant 0 : i32
    return %c0_i32, %arg0 : i32, i32
  }
  func.func @transform_3(%arg0: i32, %arg1: i32) -> (i32, i32) {
    %c0_i32 = arith.constant 0 : i32
    return %arg1, %arg0 : i32, i32
  }
}

</mosaic_0001>

<llo_original>
// kernel: tpu_custom_call.1
$region0: #{tpu_custom_call.1}
  #allocation0 [shape = 'u32[]', space=smem, size = 0x4, offset = 0x4, fixed_abs, tag = 'smem constant byte address 0x4 - core index']
  #allocation1 [shape = 'u32[72,128]{1,0:T(1,128)}', space=vmem, size = 0x9000, scoped, tag = 'internal scratch']
  %s0 = inlined_call_operand.hbm [shape: f32[8,256], index: 0, kind: input, shape index: {}]
  %s1 = inlined_call_operand.hbm [shape: f32[1,256], index: 1, kind: input, shape index: {}]
  %s2 = inlined_call_operand.hbm [shape: f32[1,256], index: 2, kind: input, shape index: {}]
  %s3 = inlined_call_operand.hbm [shape: f32[8,256], index: 3, kind: output, shape index: {}]
  %s4 = sld [smem:[#allocation0]]
  $region34: #{tpu_custom_call.1} parent=0
    _
  %s6 = ssub.s32 1, %s4
  %s7 = scalar_select 0, %s6, %s4
  $region1: #{tpu_custom_call.1} parent=0
    #allocation2 [shape = 'u8[8192]{0}', space=vmem, size = 0x2000, scoped, tag = 'input window, operand 0, single buffered']
    #allocation3 [shape = 's32[1]{0}', space=sflag, size = 0x4, scoped, tag = 'scoped memory for tpu_custom_call.1']
    #allocation4 [shape = 's32[1]{0}', space=sflag, size = 0x4, scoped, tag = 'scoped memory for tpu_custom_call.1']
    #allocation5 [shape = 'u8[1024]{0}', space=vmem, size = 0x400, scoped, tag = 'input window, operand 1, single buffered']
    #allocation6 [shape = 's32[1]{0}', space=sflag, size = 0x4, scoped, tag = 'scoped memory for tpu_custom_call.1']
    #allocation7 [shape = 'u8[1024]{0}', space=vmem, size = 0x400, scoped, tag = 'input window, operand 2, single buffered']
    #allocation8 [shape = 'u8[8192]{0}', space=vmem, size = 0x2000, scoped, tag = 'output window, operand 0, single buffered']
    %8 = vsyncpa [#allocation3], 0
    %9 = vsyncpa [#allocation6], 0
    %10 = vsyncpa [#allocation4], 0
    // Predicated region
    $region2: #{tpu_custom_call.1} parent=1 // pred_check
      _
    $region3: #{tpu_custom_call.1} parent=1 // pred_check_branch
      %12 = sbr.rel (0) target = $region5
    $region4: #{tpu_custom_call.1} parent=1 // pred_region
      %14 = vsyncadd [#allocation3], 0
      %s16 = sshll.u32 %s0, 4
      %s17 = int_to_ptr.hbm [resolvable:$true] %s16
      %s18 = sshll.u32 [#allocation2], 4
      %s19 = int_to_ptr.vmem [resolvable:$true] %s18
      %21 = dma.hbm_to_vmem [thread:$0]  %s17, 256, %s19, [#allocation3]
    $region5: #{tpu_custom_call.1} parent=1 // pred_fallthru
      _
    // Predicated region
    $region6: #{tpu_custom_call.1} parent=1 // pred_check
      _
    $region7: #{tpu_custom_call.1} parent=1 // pred_check_branch
      %23 = sbr.rel (0) target = $region9
    $region8: #{tpu_custom_call.1} parent=1 // pred_region
      %25 = vsyncadd [#allocation6], 0
      %s27 = sshll.u32 %s1, 4
      %s28 = int_to_ptr.hbm [resolvable:$true] %s27
      %s29 = sshll.u32 [#allocation5], 4
      %s30 = int_to_ptr.vmem [resolvable:$true] %s29
      %32 = dma.hbm_to_vmem [thread:$0]  %s28, 32, %s30, [#allocation6]
    $region9: #{tpu_custom_call.1} parent=1 // pred_fallthru
      _
    // Predicated region
    $region10: #{tpu_custom_call.1} parent=1 // pred_check
      _
    $region11: #{tpu_custom_call.1} parent=1 // pred_check_branch
      %34 = sbr.rel (0) target = $region13
    $region12: #{tpu_custom_call.1} parent=1 // pred_region
      %36 = vsyncadd [#allocation6], 0
      %s38 = sshll.u32 %s2, 4
      %s39 = int_to_ptr.hbm [resolvable:$true] %s38
      %s40 = sshll.u32 [#allocation7], 4
      %s41 = int_to_ptr.vmem [resolvable:$true] %s40
      %43 = dma.hbm_to_vmem [thread:$0]  %s39, 32, %s41, [#allocation6]
    $region13: #{tpu_custom_call.1} parent=1 // pred_fallthru
      _
    // Predicated region
    $region14: #{tpu_custom_call.1} parent=1 // pred_check
      _
    $region15: #{tpu_custom_call.1} parent=1 // pred_check_branch
      %45 = sbr.rel (0) target = $region17
    $region16: #{tpu_custom_call.1} parent=1 // pred_region
      %47 = dma.done [#allocation3], 256
    $region17: #{tpu_custom_call.1} parent=1 // pred_fallthru
      _
    // Predicated region
    $region18: #{tpu_custom_call.1} parent=1 // pred_check
      _
    $region19: #{tpu_custom_call.1} parent=1 // pred_check_branch
      %49 = sbr.rel (0) target = $region21
    $region20: #{tpu_custom_call.1} parent=1 // pred_region
      %51 = dma.done [#allocation6], 32
    $region21: #{tpu_custom_call.1} parent=1 // pred_fallthru
      _
    // Predicated region
    $region22: #{tpu_custom_call.1} parent=1 // pred_check
      _
    $region23: #{tpu_custom_call.1} parent=1 // pred_check_branch
      %53 = sbr.rel (0) target = $region25
    $region24: #{tpu_custom_call.1} parent=1 // pred_region
      %55 = dma.done [#allocation6], 32
    $region25: #{tpu_custom_call.1} parent=1 // pred_fallthru
      _
    %v56 = vld [vmem:[#allocation2] sm:$0xff]
    %v57 = vld [vmem:[#allocation2 + $0x8] sm:$0xff]
    %v58 = vld [vmem:[#allocation5] sm:$0x3]
    %v60 = vperm.slane %v58, 0
    %v61 = vperm.slane %v58, 1
    %v64 = vmul.f32 %v56, %v60
    %v65 = vmul.f32 %v57, %v61
    %v66 = vld [vmem:[#allocation7] sm:$0x3]
    %v68 = vperm.slane %v66, 0
    %v69 = vperm.slane %v66, 1
    %v72 = vadd.f32 %v64, %v68
    %v73 = vadd.f32 %v65, %v69
    %74 = vst [vmem:[#allocation8] sm:$0xff] %v72
    %75 = vst [vmem:[#allocation8 + $0x8] sm:$0xff] %v73
    // Predicated region
    $region26: #{tpu_custom_call.1} parent=1 // pred_check
      _
    $region27: #{tpu_custom_call.1} parent=1 // pred_check_branch
      %77 = sbr.rel (0) target = $region29
    $region28: #{tpu_custom_call.1} parent=1 // pred_region
      %79 = vsyncadd [#allocation4], 0
      %s81 = sshll.u32 [#allocation8], 4
      %s82 = int_to_ptr.vmem [resolvable:$true] %s81
      %s83 = sshll.u32 %s3, 4
      %s84 = int_to_ptr.hbm [resolvable:$true] %s83
      %86 = dma.vmem_to_hbm [thread:$0]  %s82, 256, %s84, [#allocation4]
    $region29: #{tpu_custom_call.1} parent=1 // pred_fallthru
      _
    // Predicated region
    $region30: #{tpu_custom_call.1} parent=1 // pred_check
      _
    $region31: #{tpu_custom_call.1} parent=1 // pred_check_branch
      %88 = sbr.rel (0) target = $region33
    $region32: #{tpu_custom_call.1} parent=1 // pred_region
      %90 = dma.done [#allocation4], 256
    $region33: #{tpu_custom_call.1} parent=1 // pred_fallthru
      _
    %91 = vsyncpa [#allocation3], 1
    %92 = vsyncpa [#allocation6], 1
    %93 = vsyncpa [#allocation4], 1

</llo_original>
